<compile_context>
chip_gen: v6e
topology: v6e:2x2x1
jax: 0.10.0
libtpu: 0.0.40
codegen_flags: <defaults>
</compile_context>

<pallas_src>
import math

import jax
import jax.numpy as jnp
import numpy as np
from jax.experimental import pallas as pl
from jax.experimental.pallas import tpu as pltpu

SIGMA_DIM = 32                         # fixed input feature dim of the Linears
_TILE_BUDGET_BYTES = 4 * 1024 * 1024   # per pipeline buffer (x tile / out tile)
_VMEM_LIMIT_BYTES = 48 * 1024 * 1024   # explicit scoped-VMEM ceiling (<= 64 MiB v7x)


def _affine_kernel(sigma_ref, x_ref, wg_ref, bg_ref, wb_ref, o_ref):
    # sigma_ref: (bB, 32)    batch-block of sigma
    # x_ref:     (bB, tR, L) batch/row tile of the lane-packed view of x
    # wg_ref:    (32, L)     gamma weight (transposed, lane-tiled in wrapper)
    # bg_ref:    (1, L)      gamma bias (lane-tiled)
    # wb_ref:    (32, L)     beta weight (transposed, lane-tiled, no bias)
    #
    # gamma/beta are recomputed per tile: two tiny M=bB, K=32 MXU matmuls,
    # negligible next to the tile's HBM traffic.  No carried state -> both
    # grid axes can be "parallel" (megacore sharding on either axis).
    sigma = sigma_ref[...]                                           # (bB, 32)
    gamma = jnp.dot(sigma, wg_ref[...],
                    preferred_element_type=jnp.float32) + bg_ref[...]   # (bB, L)
    beta = jnp.dot(sigma, wb_ref[...],
                   preferred_element_type=jnp.float32)                  # (bB, L)

    x = x_ref[...].astype(jnp.float32)                               # (bB, tR, L)
    o_ref[...] = (x * gamma[:, None, :] + beta[:, None, :]).astype(o_ref.dtype)


def _lane_pack_width(T, H):
    """Smallest lane-dense (multiple-of-128) last-dim width L that tiles T*H.
    Falls back to H (masked <128-lane stores) when no such repack exists."""
    L = (H * 128) // math.gcd(H, 128)          # lcm(H, 128)
    if (T * H) % L == 0:
        return L
    return H


def _choose_row_tile(num_rows, row_bytes, row_align, budget_bytes):
    """Sublane tile: full extent when it fits the per-buffer budget (always
    legal, zero padding); otherwise the largest aligned tile, preferring one
    that divides num_rows without increasing the grid-step count."""
    max_rows = max(row_align, (budget_bytes // row_bytes) // row_align * row_align)
    if num_rows <= max_rows:
        return num_rows
    steps = pl.cdiv(num_rows, max_rows)
    for t in range(max_rows, row_align - 1, -row_align):
        if pl.cdiv(num_rows, t) != steps:
            break                               # smaller tiles only add steps
        if num_rows % t == 0:
            return t                            # balanced, no padded last tile
    return max_rows


def affine_transform_layer(x, sigma, wg, bg, wb):
    """x: (B, T, H), sigma: (B, 32),
       wg: (H, 32), bg: (H,), wb: (H, 32)   (PyTorch nn.Linear layouts)."""
    B, T, H = x.shape
    elem_bytes = jnp.dtype(x.dtype).itemsize

    # ---- lane-dense repack of the (T, H) slab -------------------------------
    L = _lane_pack_width(T, H)
    pack = L // H
    R = (T * H) // L
    x_view = x.reshape(B, R, L)

    wg_t = jnp.transpose(wg)                   # (32, H)
    wb_t = jnp.transpose(wb)                   # (32, H)
    bg_2d = bg.reshape(1, H)                   # (1, H)
    if pack > 1:
        # Lane-tile once in the wrapper so gamma/beta come out of the matmul
        # already in the packed lane pattern.
        wg_t = jnp.tile(wg_t, (1, pack))       # (32, L)
        wb_t = jnp.tile(wb_t, (1, pack))       # (32, L)
        bg_2d = jnp.tile(bg_2d, (1, pack))     # (1, L)

    # ---- tiling -------------------------------------------------------------
    row_align = max(8, 32 // elem_bytes)       # 8 f32 / 16 bf16 / 32 int8-fp8
    tR = _choose_row_tile(R, L * elem_bytes, row_align, _TILE_BUDGET_BYTES)

    # Tiny-slab regime: whole per-batch slab fits one tile -> pack several
    # batch elements per grid step to amortize per-step overhead.
    bB = 1
    if tR == R:
        slab_bytes = max(1, R * L * elem_bytes)
        max_b = max(1, _TILE_BUDGET_BYTES // slab_bytes)
        if max_b >= B:
            bB = B
        else:
            for cand in range(8, min(max_b, B) + 1, 8):
                if B % cand == 0:
                    bB = cand                  # keep the largest legal divisor

    grid = (pl.cdiv(B, bB), pl.cdiv(R, tR))

    out = pl.pallas_call(
        _affine_kernel,
        out_shape=jax.ShapeDtypeStruct((B, R, L), x.dtype),
        grid_spec=pltpu.PrefetchScalarGridSpec(
            num_scalar_prefetch=0,
            grid=grid,
            in_specs=[
                pl.BlockSpec((bB, SIGMA_DIM), lambda b, t: (b, 0)),
                pl.BlockSpec((bB, tR, L), lambda b, t: (b, t, 0)),
                pl.BlockSpec((SIGMA_DIM, L), lambda b, t: (0, 0)),
                pl.BlockSpec((1, L), lambda b, t: (0, 0)),
                pl.BlockSpec((SIGMA_DIM, L), lambda b, t: (0, 0)),
            ],
            out_specs=pl.BlockSpec((bB, tR, L), lambda b, t: (b, t, 0)),
        ),
        compiler_params=pltpu.CompilerParams(
            # Stateless kernel: both axes shardable across TensorCores (v7x).
            dimension_semantics=("parallel", "parallel"),
            vmem_limit_bytes=_VMEM_LIMIT_BYTES),
    )(sigma, x_view, wg_t, bg_2d, wb_t)

    return out.reshape(B, T, H)


# ------------------------------- testing -------------------------------------

def _reference(x_f32, sigma, wg, bg, wb):
    gammas = sigma @ wg.T + bg                  # (B, H)
    betas = sigma @ wb.T                        # (B, H)
    return x_f32 * gammas[:, None, :] + betas[:, None, :]


def _run_case(key, B, T, H, dtype=jnp.float32):
    kx, ks, kwg, kbg, kwb = jax.random.split(key, 5)
    x = jax.random.normal(kx, (B, T, H), dtype=jnp.float32).astype(dtype)
    sigma = jax.random.normal(ks, (B, SIGMA_DIM), dtype=jnp.float32)
    wg = jax.random.normal(kwg, (H, SIGMA_DIM), dtype=jnp.float32) * 0.1
    bg = jax.random.normal(kbg, (H,), dtype=jnp.float32) * 0.1
    wb = jax.random.normal(kwb, (H, SIGMA_DIM), dtype=jnp.float32) * 0.1

    out = jax.block_until_ready(affine_transform_layer(x, sigma, wg, bg, wb))
    ref = _reference(x.astype(jnp.float32), sigma, wg, bg, wb)
    tol = 1e-5 if dtype == jnp.float32 else 2e-2
    np.testing.assert_allclose(np.asarray(out, dtype=np.float32),
                               np.asarray(ref), rtol=tol, atol=tol)


if __name__ == "__main__":
    key = jax.random.PRNGKey(0)
    k1, k2, k3, k4, k5 = jax.random.split(key, 5)

    # Module-native tiny shape (seq=8, hidden=32): lane-packed to L=128,
    # whole batch handled in a single grid step.
    _run_case(k1, B=2, T=8, H=32)
    # Lane-pack 2, R=68 handled as one full-extent tile (no padded last tile).
    _run_case(k2, B=2, T=136, H=64)
    # Generalized lcm lane packing: H=48 -> L=384 lane-dense stores.
    _run_case(k3, B=2, T=40, H=48)
    # Fallback path: H neither packs nor divides 128 within T*H (masked stores).
    _run_case(k4, B=2, T=10, H=20)
    # bf16 activations (f32 compute, bf16 in/out, 16-row alignment path).
    _run_case(k5, B=2, T=16, H=32, dtype=jnp.bfloat16)

    print("KERNEL_OK")
</pallas_src>

<mosaic_0001>
module attributes {stable_mosaic.version = 11 : i64} {
  func.func @_affine_kernel(%arg0: i32, %arg1: i32, %arg2: memref<2x32xf32, #tpu.memory_space<vmem>>, %arg3: memref<2x2x128xf32, #tpu.memory_space<vmem>>, %arg4: memref<32x128xf32, #tpu.memory_space<vmem>>, %arg5: memref<1x128xf32, #tpu.memory_space<vmem>>, %arg6: memref<32x128xf32, #tpu.memory_space<vmem>>, %arg7: memref<2x2x128xf32, #tpu.memory_space<vmem>>) attributes {dimension_semantics = [#tpu.dimension_semantics<parallel>, #tpu.dimension_semantics<parallel>], iteration_bounds = array<i64: 1, 1>, scalar_prefetch = 0 : i64, scratch_operands = 0 : i64, tpu.core_type = #tpu.core_type<tc>, window_params = [{transform_indices = @transform_0, window_bounds = array<i64: 2, 32>}, {transform_indices = @transform_1, window_bounds = array<i64: 2, 2, 128>}, {pipeline_mode = #tpu.pipeline_mode<synchronous>, transform_indices = @transform_2, window_bounds = array<i64: 32, 128>}, {pipeline_mode = #tpu.pipeline_mode<synchronous>, transform_indices = @transform_3, window_bounds = array<i64: 1, 128>}, {pipeline_mode = #tpu.pipeline_mode<synchronous>, transform_indices = @transform_4, window_bounds = array<i64: 32, 128>}, {transform_indices = @transform_5, window_bounds = array<i64: 2, 2, 128>}]} {
    %c0 = arith.constant 0 : index
    %c0_0 = arith.constant 0 : index
    %0 = vector.load %arg2[%c0, %c0_0] : memref<2x32xf32, #tpu.memory_space<vmem>>, vector<2x32xf32>
    %c0_1 = arith.constant 0 : index
    %c0_2 = arith.constant 0 : index
    %1 = vector.load %arg4[%c0_1, %c0_2] : memref<32x128xf32, #tpu.memory_space<vmem>>, vector<32x128xf32>
    %cst = arith.constant dense<0.000000e+00> : vector<2x128xf32>
    %2 = tpu.matmul %0, %1, %cst {dimension_numbers = #tpu.dot_dimension_numbers<[1], [0], [0], [1], [0, 0, 1, 1], [], []>} : vector<2x32xf32>, vector<32x128xf32>, vector<2x128xf32> -> vector<2x128xf32>
    %c0_3 = arith.constant 0 : index
    %c0_4 = arith.constant 0 : index
    %3 = vector.load %arg5[%c0_3, %c0_4] : memref<1x128xf32, #tpu.memory_space<vmem>>, vector<1x128xf32>
    %4 = vector.broadcast %3 : vector<1x128xf32> to vector<2x128xf32>
    %5 = arith.addf %2, %4 : vector<2x128xf32>
    %c0_5 = arith.constant 0 : index
    %c0_6 = arith.constant 0 : index
    %6 = vector.load %arg6[%c0_5, %c0_6] : memref<32x128xf32, #tpu.memory_space<vmem>>, vector<32x128xf32>
    %cst_7 = arith.constant dense<0.000000e+00> : vector<2x128xf32>
    %7 = tpu.matmul %0, %6, %cst_7 {dimension_numbers = #tpu.dot_dimension_numbers<[1], [0], [0], [1], [0, 0, 1, 1], [], []>} : vector<2x32xf32>, vector<32x128xf32>, vector<2x128xf32> -> vector<2x128xf32>
    %c0_8 = arith.constant 0 : index
    %c0_9 = arith.constant 0 : index
    %c0_10 = arith.constant 0 : index
    %8 = vector.load %arg3[%c0_8, %c0_9, %c0_10] : memref<2x2x128xf32, #tpu.memory_space<vmem>>, vector<2x2x128xf32>
    %9 = vector.shape_cast %5 : vector<2x128xf32> to vector<2x1x128xf32>
    %10 = vector.broadcast %9 : vector<2x1x128xf32> to vector<2x2x128xf32>
    %11 = arith.mulf %8, %10 : vector<2x2x128xf32>
    %12 = vector.shape_cast %7 : vector<2x128xf32> to vector<2x1x128xf32>
    %13 = vector.broadcast %12 : vector<2x1x128xf32> to vector<2x2x128xf32>
    %14 = arith.addf %11, %13 : vector<2x2x128xf32>
    %c0_11 = arith.constant 0 : index
    %c0_12 = arith.constant 0 : index
    %c0_13 = arith.constant 0 : index
    %15 = vector.load %arg7[%c0_11, %c0_12, %c0_13] : memref<2x2x128xf32, #tpu.memory_space<vmem>>, vector<2x2x128xf32>
    tpu.vector_store %arg7[%c0_11, %c0_12, %c0_13], %14 {strides = array<i32>} : memref<2x2x128xf32, #tpu.memory_space<vmem>>, vector<2x2x128xf32>,
    return
  }
  func.func @transform_0(%arg0: i32, %arg1: i32) -> (i32, i32) {
    %c0_i32 = arith.constant 0 : i32
    %c0_i32_0 = arith.constant 0 : i32
    return %arg0, %c0_i32 : i32, i32
  }
  func.func @transform_1(%arg0: i32, %arg1: i32) -> (i32, i32, i32) {
    %c0_i32 = arith.constant 0 : i32
    %c0_i32_0 = arith.constant 0 : i32
    return %arg0, %arg1, %c0_i32 : i32, i32, i32
  }
  func.func @transform_2(%arg0: i32, %arg1: i32) -> (i32, i32) {
    %c0_i32 = arith.constant 0 : i32
    %c0_i32_0 = arith.constant 0 : i32
    %c0_i32_1 = arith.constant 0 : i32
    return %c0_i32, %c0_i32_0 : i32, i32
  }
  func.func @transform_3(%arg0: i32, %arg1: i32) -> (i32, i32) {
    %c0_i32 = arith.constant 0 : i32
    %c0_i32_0 = arith.constant 0 : i32
    %c0_i32_1 = arith.constant 0 : i32
    return %c0_i32, %c0_i32_0 : i32, i32
  }
  func.func @transform_4(%arg0: i32, %arg1: i32) -> (i32, i32) {
    %c0_i32 = arith.constant 0 : i32
    %c0_i32_0 = arith.constant 0 : i32
    %c0_i32_1 = arith.constant 0 : i32
    return %c0_i32, %c0_i32_0 : i32, i32
  }
  func.func @transform_5(%arg0: i32, %arg1: i32) -> (i32, i32, i32) {
    %c0_i32 = arith.constant 0 : i32
    %c0_i32_0 = arith.constant 0 : i32
    return %arg0, %arg1, %c0_i32 : i32, i32, i32
  }
}

</mosaic_0001>

<llo_original>
// kernel: tpu_custom_call.1
$region0: #{tpu_custom_call.1}
  #allocation0 [shape = 'u32[]', space=smem, size = 0x4, offset = 0x4, fixed_abs, tag = 'smem constant byte address 0x4 - core index']
  #allocation1 [shape = 'u32[144,128]{1,0:T(1,128)}', space=vmem, size = 0x12000, scoped, tag = 'internal scratch']
  %s0 = inlined_call_operand.hbm [shape: f32[2,32], index: 0, kind: input, shape index: {}]
  %s1 = inlined_call_operand.hbm [shape: f32[2,2,128], index: 1, kind: input, shape index: {}]
  %s2 = inlined_call_operand.hbm [shape: f32[32,128], index: 2, kind: input, shape index: {}]
  %s3 = inlined_call_operand.vmem [shape: f32[1,128], index: 3, kind: input, shape index: {}]
  %s4 = inlined_call_operand.hbm [shape: f32[32,128], index: 4, kind: input, shape index: {}]
  %s5 = inlined_call_operand.hbm [shape: f32[2,2,128], index: 5, kind: output, shape index: {}]
  %s6 = sld [smem:[#allocation0]]
  $region46: #{tpu_custom_call.1} parent=0
    _
  %s8 = ssub.s32 1, %s6
  %s9 = scalar_select 0, %s8, %s6
  $region1: #{tpu_custom_call.1} parent=0
    #allocation2 [shape = 'u8[1024]{0}', space=vmem, size = 0x400, scoped, tag = 'input window, operand 0, single buffered']
    #allocation3 [shape = 's32[1]{0}', space=sflag, size = 0x4, scoped, tag = 'scoped memory for tpu_custom_call.1']
    #allocation4 [shape = 's32[1]{0}', space=sflag, size = 0x4, scoped, tag = 'scoped memory for tpu_custom_call.1']
    #allocation5 [shape = 'u8[2048]{0}', space=vmem, size = 0x800, scoped, tag = 'input window, operand 1, single buffered']
    #allocation6 [shape = 's32[1]{0}', space=sflag, size = 0x4, scoped, tag = 'scoped memory for tpu_custom_call.1']
    #allocation7 [shape = 'u8[16384]{0}', space=vmem, size = 0x4000, scoped, tag = 'input window, operand 2, single buffered']
    #allocation8 [shape = 'u8[16384]{0}', space=vmem, size = 0x4000, scoped, tag = 'input window, operand 4, single buffered']
    #allocation9 [shape = 's32[1]{0}', space=sflag, size = 0x4, scoped, tag = 'scoped memory for tpu_custom_call.1']
    #allocation10 [shape = 'u8[2048]{0}', space=vmem, size = 0x800, scoped, tag = 'output window, operand 0, single buffered']
    %10 = vsyncpa [#allocation3], 0
    %11 = vsyncpa [#allocation6], 0
    %12 = vsyncpa [#allocation9], 0
    %13 = vsyncpa [#allocation4], 0
    // Predicated region
    $region2: #{tpu_custom_call.1} parent=1 // pred_check
      _
    $region3: #{tpu_custom_call.1} parent=1 // pred_check_branch
      %15 = sbr.rel (0) target = $region5
    $region4: #{tpu_custom_call.1} parent=1 // pred_region
      %s17 = ssub.s32 32, 32
      %18 = vsyncadd [#allocation3], %s17
      %s20 = sshll.u32 [#allocation2], 4
      %s21 = int_to_ptr.vmem [resolvable:$true] %s20
      %23 = dma.hbm_to_vmem [thread:$0]  %s0, 32, %s21, [#allocation3]
    $region5: #{tpu_custom_call.1} parent=1 // pred_fallthru
      _
    // Predicated region
    $region6: #{tpu_custom_call.1} parent=1 // pred_check
      _
    $region7: #{tpu_custom_call.1} parent=1 // pred_check_branch
      %25 = sbr.rel (0) target = $region9
    $region8: #{tpu_custom_call.1} parent=1 // pred_region
      %s27 = ssub.s32 64, 64
      %28 = vsyncadd [#allocation6], %s27
      %s29 = sshll.u32 [#allocation5], 4
      %s30 = int_to_ptr.vmem [resolvable:$true] %s29
      %35 = dma.hbm_to_vmem [thread:$0]  %s1, 64, %s30, [#allocation6], 32, 32, 2
    $region9: #{tpu_custom_call.1} parent=1 // pred_fallthru
      _
    // Predicated region
    $region10: #{tpu_custom_call.1} parent=1 // pred_check
      _
    $region11: #{tpu_custom_call.1} parent=1 // pred_check_branch
      %37 = sbr.rel (0) target = $region13
    $region12: #{tpu_custom_call.1} parent=1 // pred_region
      %s39 = ssub.s32 512, 512
      %40 = vsyncadd [#allocation6], %s39
      %s41 = sshll.u32 [#allocation7], 4
      %s42 = int_to_ptr.vmem [resolvable:$true] %s41
      %47 = dma.hbm_to_vmem [thread:$0]  %s2, 512, %s42, [#allocation6], 128, 128, 8
    $region13: #{tpu_custom_call.1} parent=1 // pred_fallthru
      _
    // Predicated region
    $region14: #{tpu_custom_call.1} parent=1 // pred_check
      _
    $region15: #{tpu_custom_call.1} parent=1 // pred_check_branch
      %49 = sbr.rel (0) target = $region17
    $region16: #{tpu_custom_call.1} parent=1 // pred_region
      _
    $region17: #{tpu_custom_call.1} parent=1 // pred_fallthru
      _
    // Predicated region
    $region18: #{tpu_custom_call.1} parent=1 // pred_check
      _
    $region19: #{tpu_custom_call.1} parent=1 // pred_check_branch
      %51 = sbr.rel (0) target = $region21
    $region20: #{tpu_custom_call.1} parent=1 // pred_region
      %s53 = ssub.s32 512, 512
      %54 = vsyncadd [#allocation9], %s53
      %s55 = sshll.u32 [#allocation8], 4
      %s56 = int_to_ptr.vmem [resolvable:$true] %s55
      %61 = dma.hbm_to_vmem [thread:$0]  %s4, 512, %s56, [#allocation9], 128, 128, 8
    $region21: #{tpu_custom_call.1} parent=1 // pred_fallthru
      _
    // Predicated region
    $region22: #{tpu_custom_call.1} parent=1 // pred_check
      _
    $region23: #{tpu_custom_call.1} parent=1 // pred_check_branch
      %63 = sbr.rel (0) target = $region25
    $region24: #{tpu_custom_call.1} parent=1 // pred_region
      %64 = dma.done [#allocation3], 32
    $region25: #{tpu_custom_call.1} parent=1 // pred_fallthru
      _
    // Predicated region
    $region26: #{tpu_custom_call.1} parent=1 // pred_check
      _
    $region27: #{tpu_custom_call.1} parent=1 // pred_check_branch
      %66 = sbr.rel (0) target = $region29
    $region28: #{tpu_custom_call.1} parent=1 // pred_region
      %67 = dma.done [#allocation6], 64
    $region29: #{tpu_custom_call.1} parent=1 // pred_fallthru
      _
    // Predicated region
    $region30: #{tpu_custom_call.1} parent=1 // pred_check
      _
    $region31: #{tpu_custom_call.1} parent=1 // pred_check_branch
      %69 = sbr.rel (0) target = $region33
    $region32: #{tpu_custom_call.1} parent=1 // pred_region
      %70 = dma.done [#allocation6], 512
    $region33: #{tpu_custom_call.1} parent=1 // pred_fallthru
      _
    // Predicated region
    $region34: #{tpu_custom_call.1} parent=1 // pred_check
      _
    $region35: #{tpu_custom_call.1} parent=1 // pred_check_branch
      %72 = sbr.rel (0) target = $region37
    $region36: #{tpu_custom_call.1} parent=1 // pred_region
      %73 = dma.done [#allocation9], 512
    $region37: #{tpu_custom_call.1} parent=1 // pred_fallthru
      _
    %v74 = vld [vmem:[#allocation2] sm:$0x3]
    %v75 = vld [vmem:[#allocation7] sm:$0xff]
    %v76 = vld [vmem:[#allocation7 + $0x8] sm:$0xff]
    %v77 = vld [vmem:[#allocation7 + $0x10] sm:$0xff]
    %v78 = vld [vmem:[#allocation7 + $0x18] sm:$0xff]
    %v79 = vld [vmem:[%s3] sm:$0x1]
    %v81 = vlaneseq
    %v82 = vshrl.u32 %v81, 7
    %v83 = vsub.s32 0, %v82
    %v84 = vrot.slane %v79, %v83
    %vm86 = vcmask 261120
    %v88 = vsel %vm86, %v74, 0
    %90 = vmatprep.subr.mxu0 0.0
    %91 = vmatpush1.msra.mxu0 0.0
    %92 = vmatprep.subr.mxu0 0.0
    %93 = vmatpush1.msra.mxu0 0.0
    %94 = vmatprep.subr.mxu0 0.0
    %95 = vmatpush1.msra.mxu0 0.0
    %96 = vmatprep.subr.mxu0 0.0
    %97 = vmatpush1.msra.mxu0 0.0
    %98 = vmatprep.subr.mxu0 0.0
    %99 = vmatpush1.msra.mxu0 0.0
    %100 = vmatprep.subr.mxu0 0.0
    %101 = vmatpush1.msra.mxu0 0.0
    %102 = vmatprep.subr.mxu0 0.0
    %103 = vmatpush1.msra.mxu0 0.0
    %104 = vmatprep.subr.mxu0 0.0
    %105 = vmatpush1.msra.mxu0 0.0
    %106 = vmatprep.subr.mxu0 0.0
    %107 = vmatpush1.msra.mxu0 0.0
    %108 = vmatprep.subr.mxu0 0.0
    %109 = vmatpush1.msra.mxu0 0.0
    %110 = vmatprep.subr.mxu0 0.0
    %111 = vmatpush1.msra.mxu0 0.0
    %112 = vmatprep.subr.mxu0 0.0
    %113 = vmatpush1.msra.mxu0 0.0
    %114 = vmatprep.subr.mxu0 0.0
    %115 = vmatpush1.msra.mxu0 %v78
    %116 = vmatprep.subr.mxu0 0.0
    %117 = vmatpush1.msra.mxu0 %v77
    %118 = vmatprep.subr.mxu0 0.0
    %119 = vmatpush1.msra.mxu0 %v76
    %120 = vmatprep.subr.mxu0 0.0
    %121 = vmatpush1.msra.mxu0 %v75
    %122 = vmatprep.subr.mxu0 0.0
    %123 = vmatpush2.msra.mxu0 0.0
    %124 = vmatprep.subr.mxu0 0.0
    %125 = vmatpush2.msra.mxu0 0.0
    %126 = vmatprep.subr.mxu0 0.0
    %127 = vmatpush2.msra.mxu0 0.0
    %128 = vmatprep.subr.mxu0 0.0
    %129 = vmatpush2.msra.mxu0 0.0
    %130 = vmatprep.subr.mxu0 0.0
    %131 = vmatpush2.msra.mxu0 0.0
    %132 = vmatprep.subr.mxu0 0.0
    %133 = vmatpush2.msra.mxu0 0.0
    %134 = vmatprep.subr.mxu0 0.0
    %135 = vmatpush2.msra.mxu0 0.0
    %136 = vmatprep.subr.mxu0 0.0
    %137 = vmatpush2.msra.mxu0 0.0
    %138 = vmatprep.subr.mxu0 0.0
    %139 = vmatpush2.msra.mxu0 0.0
    %140 = vmatprep.subr.mxu0 0.0
    %141 = vmatpush2.msra.mxu0 0.0
    %142 = vmatprep.subr.mxu0 0.0
    %143 = vmatpush2.msra.mxu0 0.0
    %144 = vmatprep.subr.mxu0 0.0
    %145 = vmatpush2.msra.mxu0 0.0
    %146 = vmatprep.subr.mxu0 0.0
    %147 = vmatpush2.msra.mxu0 0.0
    %148 = vmatprep.subr.mxu0 0.0
    %149 = vmatpush2.msra.mxu0 0.0
    %150 = vmatprep.subr.mxu0 0.0
    %151 = vmatpush2.msra.mxu0 0.0
    %152 = vmatprep.subr.mxu0 0.0
    %153 = vmatpush2.msra.mxu0 0.0
    %154 = vmatprep.mubr.f32.mxu0 0.0
    %155 = vmatmul.mubr.f32.gmra.mxu0 %v88
    %v156 = vpop.f32.mrf.mxu0
    %v157 = vadd.f32 %v84, %v156
    %v158 = vpop.f32.mrf.mxu0
    %159 = vdwg.mxu0
    %v160 = vld [vmem:[#allocation8] sm:$0xff]
    %v161 = vld [vmem:[#allocation8 + $0x8] sm:$0xff]
    %v162 = vld [vmem:[#allocation8 + $0x10] sm:$0xff]
    %v163 = vld [vmem:[#allocation8 + $0x18] sm:$0xff]
    %164 = vmatprep.subr.mxu0 0.0
    %165 = vmatpush1.msra.mxu0 0.0
    %166 = vmatprep.subr.mxu0 0.0
    %167 = vmatpush1.msra.mxu0 0.0
    %168 = vmatprep.subr.mxu0 0.0
    %169 = vmatpush1.msra.mxu0 0.0
    %170 = vmatprep.subr.mxu0 0.0
    %171 = vmatpush1.msra.mxu0 0.0
    %172 = vmatprep.subr.mxu0 0.0
    %173 = vmatpush1.msra.mxu0 0.0
    %174 = vmatprep.subr.mxu0 0.0
    %175 = vmatpush1.msra.mxu0 0.0
    %176 = vmatprep.subr.mxu0 0.0
    %177 = vmatpush1.msra.mxu0 0.0
    %178 = vmatprep.subr.mxu0 0.0
    %179 = vmatpush1.msra.mxu0 0.0
    %180 = vmatprep.subr.mxu0 0.0
    %181 = vmatpush1.msra.mxu0 0.0
    %182 = vmatprep.subr.mxu0 0.0
    %183 = vmatpush1.msra.mxu0 0.0
    %184 = vmatprep.subr.mxu0 0.0
    %185 = vmatpush1.msra.mxu0 0.0
    %186 = vmatprep.subr.mxu0 0.0
    %187 = vmatpush1.msra.mxu0 0.0
    %188 = vmatprep.subr.mxu0 0.0
    %189 = vmatpush1.msra.mxu0 %v163
    %190 = vmatprep.subr.mxu0 0.0
    %191 = vmatpush1.msra.mxu0 %v162
    %192 = vmatprep.subr.mxu0 0.0
    %193 = vmatpush1.msra.mxu0 %v161
    %194 = vmatprep.subr.mxu0 0.0
    %195 = vmatpush1.msra.mxu0 %v160
    %196 = vmatprep.subr.mxu0 0.0
    %197 = vmatpush2.msra.mxu0 0.0
    %198 = vmatprep.subr.mxu0 0.0
    %199 = vmatpush2.msra.mxu0 0.0
    %200 = vmatprep.subr.mxu0 0.0
    %201 = vmatpush2.msra.mxu0 0.0
    %202 = vmatprep.subr.mxu0 0.0
    %203 = vmatpush2.msra.mxu0 0.0
    %204 = vmatprep.subr.mxu0 0.0
    %205 = vmatpush2.msra.mxu0 0.0
    %206 = vmatprep.subr.mxu0 0.0
    %207 = vmatpush2.msra.mxu0 0.0
    %208 = vmatprep.subr.mxu0 0.0
    %209 = vmatpush2.msra.mxu0 0.0
    %210 = vmatprep.subr.mxu0 0.0
    %211 = vmatpush2.msra.mxu0 0.0
    %212 = vmatprep.subr.mxu0 0.0
    %213 = vmatpush2.msra.mxu0 0.0
    %214 = vmatprep.subr.mxu0 0.0
    %215 = vmatpush2.msra.mxu0 0.0
    %216 = vmatprep.subr.mxu0 0.0
    %217 = vmatpush2.msra.mxu0 0.0
    %218 = vmatprep.subr.mxu0 0.0
    %219 = vmatpush2.msra.mxu0 0.0
    %220 = vmatprep.subr.mxu0 0.0
    %221 = vmatpush2.msra.mxu0 0.0
    %222 = vmatprep.subr.mxu0 0.0
    %223 = vmatpush2.msra.mxu0 0.0
    %224 = vmatprep.subr.mxu0 0.0
    %225 = vmatpush2.msra.mxu0 0.0
    %226 = vmatprep.subr.mxu0 0.0
    %227 = vmatpush2.msra.mxu0 0.0
    %228 = vmatprep.mubr.f32.mxu0 0.0
    %229 = vmatmul.mubr.f32.gmra.mxu0 %v88
    %v230 = vpop.f32.mrf.mxu0
    %v231 = vadd.f32 0.0, %v230
    %v232 = vpop.f32.mrf.mxu0
    %233 = vdwg.mxu0
    %v234 = vld [vmem:[#allocation5] sm:$0x3]
    %v235 = vld [vmem:[#allocation5 + $0x2] sm:$0x3]
    %v238 = vunpack.c.l.s4 1966171168
    %v239 = vunpack.c.0.s8 %v238
    %v240 = vlaneseq
    %v241 = vshrl.u32 %v240, 7
    %v242 = vsub.s32 %v239, %v241
    %v243 = vrot.slane %v157, %v242
    %v244 = vcombine.high %v243, %v243
    %v246 = vunpack.c.l.s4 1966171168
    %v247 = vunpack.c.0.s8 %v246
    %v248 = vlaneseq
    %v249 = vshrl.u32 %v248, 7
    %v250 = vsub.s32 %v247, %v249
    %v251 = vrot.slane %v243, %v250
    %v253 = vunpack.c.l.s4 1966171168
    %v254 = vunpack.c.0.s8 %v253
    %v255 = vlaneseq
    %v256 = vshrl.u32 %v255, 7
    %v257 = vsub.s32 %v254, %v256
    %v258 = vrot.slane %v244, %v257
    %v259 = vlaneseq
    %v260 = vshrl.u32 %v259, 7
    %v261 = vsub.s32 0, %v260
    %v262 = vrot.slane %v251, %v261
    %v263 = vlaneseq
    %v264 = vshrl.u32 %v263, 7
    %v265 = vsub.s32 0, %v264
    %v266 = vrot.slane %v258, %v265
    %v269 = vmul.f32 %v234, %v262
    %v270 = vmul.f32 %v235, %v266
    %v273 = vunpack.c.l.s4 1966171168
    %v274 = vunpack.c.0.s8 %v273
    %v275 = vlaneseq
    %v276 = vshrl.u32 %v275, 7
    %v277 = vsub.s32 %v274, %v276
    %v278 = vrot.slane %v231, %v277
    %v279 = vcombine.high %v278, %v278
    %v281 = vunpack.c.l.s4 1966171168
    %v282 = vunpack.c.0.s8 %v281
    %v283 = vlaneseq
    %v284 = vshrl.u32 %v283, 7
    %v285 = vsub.s32 %v282, %v284
    %v286 = vrot.slane %v278, %v285
    %v288 = vunpack.c.l.s4 1966171168
    %v289 = vunpack.c.0.s8 %v288
    %v290 = vlaneseq
    %v291 = vshrl.u32 %v290, 7
    %v292 = vsub.s32 %v289, %v291
    %v293 = vrot.slane %v279, %v292
    %v294 = vlaneseq
    %v295 = vshrl.u32 %v294, 7
    %v296 = vsub.s32 0, %v295
    %v297 = vrot.slane %v286, %v296
    %v298 = vlaneseq
    %v299 = vshrl.u32 %v298, 7
    %v300 = vsub.s32 0, %v299
    %v301 = vrot.slane %v293, %v300
    %v304 = vadd.f32 %v269, %v297
    %v305 = vadd.f32 %v270, %v301
    %306 = vst [vmem:[#allocation10] sm:$0x3] %v304
    %307 = vst [vmem:[#allocation10 + $0x2] sm:$0x3] %v305
    // Predicated region
    $region38: #{tpu_custom_call.1} parent=1 // pred_check
      _
    $region39: #{tpu_custom_call.1} parent=1 // pred_check_branch
      %309 = sbr.rel (0) target = $region41
    $region40: #{tpu_custom_call.1} parent=1 // pred_region
      %s311 = ssub.s32 64, 64
      %312 = vsyncadd [#allocation4], %s311
      %s313 = sshll.u32 [#allocation10], 4
      %s314 = int_to_ptr.vmem [resolvable:$true] %s313
      %319 = dma.vmem_to_hbm [thread:$0]  %s314, 64, %s5, [#allocation4], 32, 32, 2
    $region41: #{tpu_custom_call.1} parent=1 // pred_fallthru
      _
    // Predicated region
    $region42: #{tpu_custom_call.1} parent=1 // pred_check
      _
    $region43: #{tpu_custom_call.1} parent=1 // pred_check_branch
      %321 = sbr.rel (0) target = $region45
    $region44: #{tpu_custom_call.1} parent=1 // pred_region
      %322 = dma.done [#allocation4], 64
    $region45: #{tpu_custom_call.1} parent=1 // pred_fallthru
      _
    %323 = vsyncpa [#allocation3], 1
    %324 = vsyncpa [#allocation6], 1
    %325 = vsyncpa [#allocation9], 1
    %326 = vsyncpa [#allocation4], 1

</llo_original>
